<compile_context>
chip_gen: v7x
topology: tpu7x:2x2x1
jax: 0.10.0
libtpu: 0.0.40
codegen_flags: <defaults>
</compile_context>

<pallas_src>
import functools

import jax
import jax.numpy as jnp
from jax.experimental import pallas as pl
from jax.experimental.pallas import tpu as pltpu

_MIB = 1024 * 1024
_OUT_BLOCK = (8, 128)          # one lane-dense partial-sum block per TensorCore


def _round_up(x: int, m: int) -> int:
    return ((x + m - 1) // m) * m


def _cdiv(a: int, b: int) -> int:
    return -(-a // b)


def _vmem_plan():
    """Return (input-tile VMEM budget, vmem_limit_bytes), generation aware."""
    cap = None
    try:
        cap = getattr(pltpu.get_tpu_info(), "vmem_capacity_bytes", None)
    except Exception:
        cap = None
    if not cap or cap <= 64 * _MIB:
        # v7x-class (64 MiB per TC) or unknown generation: stay conservative.
        return 16 * _MIB, 40 * _MIB
    # v5e / v6e: 128 MiB physical VMEM -> larger tiles, fewer grid steps.
    return 48 * _MIB, 96 * _MIB


def _choose_tiling(batch, feat, itemsize, tb_max, sublane):
    """Pick (tile_rows, n_cores, tiles_per_core).

    Priorities (per perf review):
      1. per-step inbound DMA >= ~2 MiB (when the batch is big enough),
      2. even tile count -> 2-way core split on v7x megacore,
      3. >= 3 tiles per core so DMA is actually pipelined,
      4. otherwise as few tiles as possible (amortize the ~0.35 us/step cost).
    """
    bytes_per_row = 3 * feat * itemsize            # anchor + positive + negative
    dma_floor = 2 * _MIB
    b_pad = _round_up(batch, sublane)
    tb_cap = min(tb_max, b_pad)
    can_meet_floor = tb_cap * bytes_per_row >= dma_floor

    best = None
    nt_start = _cdiv(batch, tb_cap)
    nt_max = _cdiv(batch, sublane)
    for nt in range(nt_start, nt_max + 1):
        tb = _round_up(_cdiv(batch, nt), sublane)
        if tb > tb_cap:
            continue
        if _cdiv(batch, tb) != nt:                 # rounding collapsed onto fewer tiles
            continue
        n_cores = 2 if (nt > 1 and nt % 2 == 0) else 1
        tpc = nt // n_cores
        meets_floor = (tb * bytes_per_row >= dma_floor) or (not can_meet_floor)
        score = (meets_floor, n_cores, min(tpc, 3), -nt)
        if best is None or score > best[0]:
            best = (score, tb, n_cores, tpc)
        if best[0][:3] == (True, 2, 3):
            break                                  # can't be beaten by more tiles

    _, tb, n_cores, tpc = best
    if n_cores == 1 and tpc == 1:
        # Single tile: use the exact batch size (block == full array dim is
        # always a legal BlockSpec, avoids any over-read padding).
        tb = batch
    return tb, n_cores, tpc


def _triplet_kernel(a_ref, p_ref, n_ref, out_ref, acc_ref, *,
                    margin, metric, batch_size, tile_b, feat_dim, use_mxu):
    c = pl.program_id(0)          # core / 'parallel' axis
    i = pl.program_id(1)          # batch-tile / reduction axis

    @pl.when(i == 0)
    def _init():
        acc_ref[...] = jnp.zeros_like(acc_ref)

    a = a_ref[...].astype(jnp.float32)
    p = p_ref[...].astype(jnp.float32)
    n = n_ref[...].astype(jnp.float32)

    if metric == "cosine":
        eps = jnp.float32(1e-8)   # matches torch F.cosine_similarity default

        if use_mxu:
            # Offload the five cross-lane reductions to the (otherwise idle) MXU:
            # (TB, D) @ (D, 128) with a ones operand -> every lane holds the row
            # sum; keep f32 accumulation (Precision.HIGHEST) for parity with the
            # f32 reference.
            ones_mat = jnp.ones((feat_dim, 128), jnp.float32)

            def row_sum(x):
                s = jax.lax.dot_general(
                    x, ones_mat,
                    dimension_numbers=(((1,), (0,)), ((), ())),
                    preferred_element_type=jnp.float32,
                    precision=jax.lax.Precision.HIGHEST)
                return s[:, 0:1]
        else:
            def row_sum(x):
                return jnp.sum(x, axis=-1, keepdims=True)

        dot_ap = row_sum(a * p)
        dot_an = row_sum(a * n)
        sq_a = row_sum(a * a)
        sq_p = row_sum(p * p)
        sq_n = row_sum(n * n)
        # cos = dot / max(||a||*||x||, eps) == dot * rsqrt(max(sq_a*sq_x, eps^2))
        # rsqrt runs on the EUP (its own bundle slot) instead of VPU sqrt + div.
        cos_ap = dot_ap * jax.lax.rsqrt(jnp.maximum(sq_a * sq_p, eps * eps))
        cos_an = dot_an * jax.lax.rsqrt(jnp.maximum(sq_a * sq_n, eps * eps))
        d_pos = 1.0 - cos_ap
        d_neg = 1.0 - cos_an
    else:  # euclidean — matches torch F.pairwise_distance (eps added per element)
        eps = jnp.float32(1e-6)
        dp = a - p + eps
        dn = a - n + eps
        d_pos = jnp.sqrt(jnp.sum(dp * dp, axis=-1, keepdims=True))
        d_neg = jnp.sqrt(jnp.sum(dn * dn, axis=-1, keepdims=True))

    hinge = jnp.maximum(d_pos - d_neg + jnp.float32(margin), 0.0)   # (TB, 1)

    # Mask rows past the true batch (boundary-tile padding) with a SELECT so any
    # NaN/Inf computed from over-read pad rows never reaches the accumulator.
    block_idx = c * pl.num_programs(1) + i
    row = block_idx * tile_b + jax.lax.broadcasted_iota(jnp.int32, hinge.shape, 0)
    hinge = jnp.where(row < batch_size, hinge, 0.0)

    acc_ref[...] += hinge

    @pl.when(i == pl.num_programs(1) - 1)
    def _finalize():
        total = jnp.sum(acc_ref[...], axis=0, keepdims=True)       # (1, 1)
        out_ref[...] = jnp.broadcast_to(total, out_ref.shape)      # splat the block


def triplet_loss(anchor, positive, negative, *, margin=0.2,
                 distance_metric="cosine", max_block_rows=None,
                 use_mxu_reductions=None):
    """Pallas TPU triplet loss (mean over the batch). anchor/positive/negative: (B, D)."""
    if distance_metric not in ("euclidean", "cosine"):
        raise ValueError("distance_metric must be 'euclidean' or 'cosine'")
    assert anchor.ndim == 2 and anchor.shape == positive.shape == negative.shape
    B, D = anchor.shape

    itemsize = int(jnp.dtype(anchor.dtype).itemsize)
    sublane = {4: 8, 2: 16, 1: 32}.get(itemsize, 8)     # bf16 -> 16, int8 -> 32

    tile_budget, vmem_limit = _vmem_plan()
    # 3 inputs x 2 pipeline buffers x TB x D x itemsize <= tile_budget
    tb_max = max(sublane,
                 (tile_budget // (3 * 2 * D * itemsize)) // sublane * sublane)
    if max_block_rows is not None:
        tb_max = max(sublane, min(tb_max, _round_up(int(max_block_rows), sublane)))

    tb, n_cores, tiles_per_core = _choose_tiling(B, D, itemsize, tb_max, sublane)

    if use_mxu_reductions is None:
        # v7x (and v6e for very small D) is XLU-bound on the cosine reductions;
        # the MXU path is neutral on v5e (MXU idle either way, f32 accumulation).
        use_mxu_reductions = (distance_metric == "cosine") and (D <= 256)

    kernel = functools.partial(
        _triplet_kernel, margin=float(margin), metric=distance_metric,
        batch_size=B, tile_b=tb, feat_dim=D, use_mxu=bool(use_mxu_reductions))

    idx = lambda c, i: (c * tiles_per_core + i, 0)
    partials = pl.pallas_call(
        kernel,
        out_shape=jax.ShapeDtypeStruct((n_cores * _OUT_BLOCK[0], _OUT_BLOCK[1]),
                                       jnp.float32),
        grid=(n_cores, tiles_per_core),
        in_specs=[
            pl.BlockSpec((tb, D), idx),
            pl.BlockSpec((tb, D), idx),
            pl.BlockSpec((tb, D), idx),
        ],
        out_specs=pl.BlockSpec(_OUT_BLOCK, lambda c, i: (c, 0)),
        scratch_shapes=[pltpu.VMEM((tb, 1), jnp.float32)],
        compiler_params=pltpu.CompilerParams(
            dimension_semantics=("parallel", "arbitrary"),
            vmem_limit_bytes=vmem_limit),
    )(anchor, positive, negative)

    # One partial sum per core; the reshape mirrors _OUT_BLOCK (kept in sync).
    per_core = partials.reshape(n_cores, _OUT_BLOCK[0], _OUT_BLOCK[1])[:, 0, 0]
    return jnp.sum(per_core) / jnp.float32(B)


def _triplet_loss_ref(anchor, positive, negative, *, margin=0.2,
                      distance_metric="cosine"):
    a = anchor.astype(jnp.float32)
    p = positive.astype(jnp.float32)
    n = negative.astype(jnp.float32)
    if distance_metric == "cosine":
        eps = 1e-8

        def cos(x, y):
            num = jnp.sum(x * y, axis=-1)
            den = jnp.maximum(jnp.linalg.norm(x, axis=-1)
                              * jnp.linalg.norm(y, axis=-1), eps)
            return num / den

        d_pos = 1.0 - cos(a, p)
        d_neg = 1.0 - cos(a, n)
    else:
        eps = 1e-6
        d_pos = jnp.linalg.norm(a - p + eps, axis=-1)
        d_neg = jnp.linalg.norm(a - n + eps, axis=-1)
    return jnp.mean(jnp.maximum(d_pos - d_neg + margin, 0.0))


if __name__ == "__main__":
    root = jax.random.PRNGKey(0)
    keys = jax.random.split(root, 4)

    def make_inputs(k, batch, dim):
        k1, k2, k3 = jax.random.split(k, 3)
        return (jax.random.normal(k1, (batch, dim), jnp.float32),
                jax.random.normal(k2, (batch, dim), jnp.float32),
                jax.random.normal(k3, (batch, dim), jnp.float32))

    def check(batch, dim, key, metric, *, max_block_rows=None,
              use_mxu_reductions=False, atol=1e-5, rtol=1e-5):
        a, p, n = make_inputs(key, batch, dim)
        out = jax.block_until_ready(
            triplet_loss(a, p, n, margin=0.2, distance_metric=metric,
                         max_block_rows=max_block_rows,
                         use_mxu_reductions=use_mxu_reductions))
        ref = _triplet_loss_ref(a, p, n, margin=0.2, distance_metric=metric)
        assert jnp.allclose(out, ref, atol=atol, rtol=rtol), (
            metric, batch, dim, use_mxu_reductions, float(out), float(ref))

    # 1) Tiny embedding batch: single full-array tile path.
    for metric in ("cosine", "euclidean"):
        check(8, 32, keys[0], metric)

    # 2) Forced small tiles -> 1 core x 3 steps, boundary-row masking.
    for metric in ("cosine", "euclidean"):
        check(20, 128, keys[1], metric, max_block_rows=8)

    # 3) Even tile count -> 2-way 'parallel' core split + masked last tile.
    for metric in ("cosine", "euclidean"):
        check(28, 128, keys[2], metric, max_block_rows=8)

    # 3b) MXU row-reduction path for cosine (v7x/v6e small-D optimization).
    #     Slightly looser tolerance: MXU pass count / accumulation order can
    #     differ marginally from the sequential f32 reference (review note).
    check(28, 128, keys[2], "cosine", max_block_rows=8,
          use_mxu_reductions=True, atol=1e-3, rtol=1e-3)

    # 4) Default heuristics (auto tiling; cosine auto-selects the MXU path at D<=256).
    check(64, 256, keys[3], "cosine", use_mxu_reductions=None, atol=1e-3, rtol=1e-3)
    check(64, 256, keys[3], "euclidean", use_mxu_reductions=None)

    print("KERNEL_OK")
</pallas_src>

<mosaic_0001>
module attributes {stable_mosaic.version = 11 : i64} {
  func.func @_triplet_kernel(%arg0: i32, %arg1: i32, %arg2: memref<8x32xf32, #tpu.memory_space<vmem>>, %arg3: memref<8x32xf32, #tpu.memory_space<vmem>>, %arg4: memref<8x32xf32, #tpu.memory_space<vmem>>, %arg5: memref<8x128xf32, #tpu.memory_space<vmem>>, %arg6: memref<8x1xf32, #tpu.memory_space<vmem>>) attributes {dimension_semantics = [#tpu.dimension_semantics<parallel>, #tpu.dimension_semantics<arbitrary>], iteration_bounds = array<i64: 1, 1>, scalar_prefetch = 0 : i64, scratch_operands = 1 : i64, tpu.core_type = #tpu.core_type<tc>, window_params = [{transform_indices = @transform_0, window_bounds = array<i64: 8, 32>}, {transform_indices = @transform_1, window_bounds = array<i64: 8, 32>}, {transform_indices = @transform_2, window_bounds = array<i64: 8, 32>}, {transform_indices = @transform_3, window_bounds = array<i64: 8, 128>}]} {
    %c0_i32 = arith.constant 0 : i32
    %0 = arith.cmpi eq, %arg1, %c0_i32 : i32
    %1 = arith.extui %0 : i1 to i32
    %c0_i32_0 = arith.constant 0 : i32
    %2 = arith.cmpi ne, %1, %c0_i32_0 : i32
    scf.if %2 {
      %cst_26 = arith.constant 0.000000e+00 : f32
      %58 = vector.broadcast %cst_26 : f32 to vector<8x1xf32>
      %c0_27 = arith.constant 0 : index
      %c0_28 = arith.constant 0 : index
      %59 = vector.load %arg6[%c0_27, %c0_28] : memref<8x1xf32, #tpu.memory_space<vmem>>, vector<8x1xf32>
      tpu.vector_store %arg6[%c0_27, %c0_28], %58 {strides = array<i32>} : memref<8x1xf32, #tpu.memory_space<vmem>>, vector<8x1xf32>,
    } else {
    }
    %c0 = arith.constant 0 : index
    %c0_1 = arith.constant 0 : index
    %3 = vector.load %arg2[%c0, %c0_1] : memref<8x32xf32, #tpu.memory_space<vmem>>, vector<8x32xf32>
    %c0_2 = arith.constant 0 : index
    %c0_3 = arith.constant 0 : index
    %4 = vector.load %arg3[%c0_2, %c0_3] : memref<8x32xf32, #tpu.memory_space<vmem>>, vector<8x32xf32>
    %c0_4 = arith.constant 0 : index
    %c0_5 = arith.constant 0 : index
    %5 = vector.load %arg4[%c0_4, %c0_5] : memref<8x32xf32, #tpu.memory_space<vmem>>, vector<8x32xf32>
    %6 = arith.mulf %3, %4 : vector<8x32xf32>
    %cst = arith.constant dense<0.000000e+00> : vector<8xf32>
    %7 = vector.multi_reduction <add>, %6, %cst [1] : vector<8x32xf32> to vector<8xf32>
    %8 = vector.shape_cast %7 : vector<8xf32> to vector<8x1xf32>
    %9 = arith.mulf %3, %5 : vector<8x32xf32>
    %cst_6 = arith.constant dense<0.000000e+00> : vector<8xf32>
    %10 = vector.multi_reduction <add>, %9, %cst_6 [1] : vector<8x32xf32> to vector<8xf32>
    %11 = vector.shape_cast %10 : vector<8xf32> to vector<8x1xf32>
    %12 = arith.mulf %3, %3 : vector<8x32xf32>
    %cst_7 = arith.constant dense<0.000000e+00> : vector<8xf32>
    %13 = vector.multi_reduction <add>, %12, %cst_7 [1] : vector<8x32xf32> to vector<8xf32>
    %14 = vector.shape_cast %13 : vector<8xf32> to vector<8x1xf32>
    %15 = arith.mulf %4, %4 : vector<8x32xf32>
    %cst_8 = arith.constant dense<0.000000e+00> : vector<8xf32>
    %16 = vector.multi_reduction <add>, %15, %cst_8 [1] : vector<8x32xf32> to vector<8xf32>
    %17 = vector.shape_cast %16 : vector<8xf32> to vector<8x1xf32>
    %18 = arith.mulf %5, %5 : vector<8x32xf32>
    %cst_9 = arith.constant dense<0.000000e+00> : vector<8xf32>
    %19 = vector.multi_reduction <add>, %18, %cst_9 [1] : vector<8x32xf32> to vector<8xf32>
    %20 = vector.shape_cast %19 : vector<8xf32> to vector<8x1xf32>
    %21 = arith.mulf %14, %17 : vector<8x1xf32>
    %cst_10 = arith.constant 9.99999993E-9 : f32
    %cst_11 = arith.constant 9.99999993E-9 : f32
    %22 = arith.mulf %cst_10, %cst_11 : f32
    %23 = vector.broadcast %22 : f32 to vector<8x1xf32>
    %24 = arith.maximumf %21, %23 : vector<8x1xf32>
    %25 = math.rsqrt %24 : vector<8x1xf32>
    %26 = arith.mulf %8, %25 : vector<8x1xf32>
    %27 = arith.mulf %14, %20 : vector<8x1xf32>
    %cst_12 = arith.constant 9.99999993E-9 : f32
    %cst_13 = arith.constant 9.99999993E-9 : f32
    %28 = arith.mulf %cst_12, %cst_13 : f32
    %29 = vector.broadcast %28 : f32 to vector<8x1xf32>
    %30 = arith.maximumf %27, %29 : vector<8x1xf32>
    %31 = math.rsqrt %30 : vector<8x1xf32>
    %32 = arith.mulf %11, %31 : vector<8x1xf32>
    %cst_14 = arith.constant 1.000000e+00 : f32
    %33 = vector.broadcast %cst_14 : f32 to vector<8x1xf32>
    %34 = arith.subf %33, %26 : vector<8x1xf32>
    %cst_15 = arith.constant 1.000000e+00 : f32
    %35 = vector.broadcast %cst_15 : f32 to vector<8x1xf32>
    %36 = arith.subf %35, %32 : vector<8x1xf32>
    %37 = arith.subf %34, %36 : vector<8x1xf32>
    %cst_16 = arith.constant 2.000000e-01 : f32
    %38 = vector.broadcast %cst_16 : f32 to vector<8x1xf32>
    %39 = arith.addf %37, %38 : vector<8x1xf32>
    %cst_17 = arith.constant 0.000000e+00 : f32
    %40 = vector.broadcast %cst_17 : f32 to vector<8x1xf32>
    %41 = arith.maximumf %39, %40 : vector<8x1xf32>
    %c1_i32 = arith.constant 1 : i32
    %42 = arith.muli %arg0, %c1_i32 : i32
    %43 = arith.addi %42, %arg1 : i32
    %c8_i32 = arith.constant 8 : i32
    %44 = arith.muli %43, %c8_i32 : i32
    %45 = tpu.iota {dimensions = array<i32: 0>} : vector<8x1xi32>
    %46 = vector.broadcast %44 : i32 to vector<8x1xi32>
    %47 = arith.addi %46, %45 : vector<8x1xi32>
    %c8_i32_18 = arith.constant 8 : i32
    %48 = vector.broadcast %c8_i32_18 : i32 to vector<8x1xi32>
    %49 = arith.cmpi slt, %47, %48 : vector<8x1xi32>
    %cst_19 = arith.constant 0.000000e+00 : f32
    %50 = vector.broadcast %cst_19 : f32 to vector<8x1xf32>
    %51 = arith.select %49, %41, %50 : vector<8x1xi1>, vector<8x1xf32>
    %c0_20 = arith.constant 0 : index
    %c0_21 = arith.constant 0 : index
    %52 = vector.load %arg6[%c0_20, %c0_21] : memref<8x1xf32, #tpu.memory_space<vmem>>, vector<8x1xf32>
    %53 = arith.addf %52, %51 : vector<8x1xf32>
    %c0_22 = arith.constant 0 : index
    %c0_23 = arith.constant 0 : index
    %54 = vector.load %arg6[%c0_22, %c0_23] : memref<8x1xf32, #tpu.memory_space<vmem>>, vector<8x1xf32>
    tpu.vector_store %arg6[%c0_22, %c0_23], %53 {strides = array<i32>} : memref<8x1xf32, #tpu.memory_space<vmem>>, vector<8x1xf32>,
    %c0_i32_24 = arith.constant 0 : i32
    %55 = arith.cmpi eq, %arg1, %c0_i32_24 : i32
    %56 = arith.extui %55 : i1 to i32
    %c0_i32_25 = arith.constant 0 : i32
    %57 = arith.cmpi ne, %56, %c0_i32_25 : i32
    scf.if %57 {
      %c0_26 = arith.constant 0 : index
      %c0_27 = arith.constant 0 : index
      %58 = vector.load %arg6[%c0_26, %c0_27] : memref<8x1xf32, #tpu.memory_space<vmem>>, vector<8x1xf32>
      %cst_28 = arith.constant dense<0.000000e+00> : vector<1xf32>
      %59 = vector.multi_reduction <add>, %58, %cst_28 [0] : vector<8x1xf32> to vector<1xf32>
      %60 = vector.shape_cast %59 : vector<1xf32> to vector<1x1xf32>
      %61 = vector.shape_cast %60 : vector<1x1xf32> to vector<1x1xf32>
      %62 = vector.broadcast %61 : vector<1x1xf32> to vector<8x128xf32>
      %c0_29 = arith.constant 0 : index
      %c0_30 = arith.constant 0 : index
      %63 = vector.load %arg5[%c0_29, %c0_30] : memref<8x128xf32, #tpu.memory_space<vmem>>, vector<8x128xf32>
      tpu.vector_store %arg5[%c0_29, %c0_30], %62 {strides = array<i32>} : memref<8x128xf32, #tpu.memory_space<vmem>>, vector<8x128xf32>,
    } else {
    }
    return
  }
  func.func @transform_0(%arg0: i32, %arg1: i32) -> (i32, i32) {
    %c1_i32 = arith.constant 1 : i32
    %0 = arith.muli %arg0, %c1_i32 : i32
    %1 = arith.addi %0, %arg1 : i32
    %c0_i32 = arith.constant 0 : i32
    %c0_i32_0 = arith.constant 0 : i32
    return %1, %c0_i32 : i32, i32
  }
  func.func @transform_1(%arg0: i32, %arg1: i32) -> (i32, i32) {
    %c1_i32 = arith.constant 1 : i32
    %0 = arith.muli %arg0, %c1_i32 : i32
    %1 = arith.addi %0, %arg1 : i32
    %c0_i32 = arith.constant 0 : i32
    %c0_i32_0 = arith.constant 0 : i32
    return %1, %c0_i32 : i32, i32
  }
  func.func @transform_2(%arg0: i32, %arg1: i32) -> (i32, i32) {
    %c1_i32 = arith.constant 1 : i32
    %0 = arith.muli %arg0, %c1_i32 : i32
    %1 = arith.addi %0, %arg1 : i32
    %c0_i32 = arith.constant 0 : i32
    %c0_i32_0 = arith.constant 0 : i32
    return %1, %c0_i32 : i32, i32
  }
  func.func @transform_3(%arg0: i32, %arg1: i32) -> (i32, i32) {
    %c0_i32 = arith.constant 0 : i32
    %c0_i32_0 = arith.constant 0 : i32
    return %arg0, %c0_i32 : i32, i32
  }
}

</mosaic_0001>

<llo_original>
// kernel: tpu_custom_call.1
$region0: #{tpu_custom_call.1}
  #allocation0 [shape = 'u32[]', space=smem, size = 0x4, offset = 0x4, fixed_abs, tag = 'smem constant byte address 0x4 - core index']
  #allocation1 [shape = 'u32[144,128]{1,0:T(1,128)}', space=vmem, size = 0x12000, scoped, tag = 'internal scratch']
  #allocation2 [shape = 'f32[8,1]{1,0:T(8,128)}', space=vmem, size = 0x1000, scoped, tag = 'scratch operand']
  %s0 = inlined_call_operand.hbm [shape: f32[8,32], index: 0, kind: input, shape index: {}]
  %s1 = inlined_call_operand.hbm [shape: f32[8,32], index: 1, kind: input, shape index: {}]
  %s2 = inlined_call_operand.hbm [shape: f32[8,32], index: 2, kind: input, shape index: {}]
  %s3 = inlined_call_operand.hbm [shape: f32[8,128], index: 3, kind: output, shape index: {}]
  %s4 = sld [smem:[#allocation0]]
  $region42: #{tpu_custom_call.1} parent=0
    _
  %s6 = ssub.s32 1, %s4
  %s7 = scalar_select 0, %s6, %s4
  $region1: #{tpu_custom_call.1} parent=0
    #allocation3 [shape = 'u8[4096]{0}', space=vmem, size = 0x1000, scoped, tag = 'input window, operand 0, single buffered']
    #allocation4 [shape = 's32[1]{0}', space=sflag, size = 0x4, scoped, tag = 'scoped memory for tpu_custom_call.1']
    #allocation5 [shape = 's32[1]{0}', space=sflag, size = 0x4, scoped, tag = 'scoped memory for tpu_custom_call.1']
    #allocation6 [shape = 'u8[4096]{0}', space=vmem, size = 0x1000, scoped, tag = 'input window, operand 1, single buffered']
    #allocation7 [shape = 's32[1]{0}', space=sflag, size = 0x4, scoped, tag = 'scoped memory for tpu_custom_call.1']
    #allocation8 [shape = 'u8[4096]{0}', space=vmem, size = 0x1000, scoped, tag = 'input window, operand 2, single buffered']
    #allocation9 [shape = 'u8[4096]{0}', space=vmem, size = 0x1000, scoped, tag = 'output window, operand 0, single buffered']
    %8 = vsyncpa [#allocation4], 0
    %9 = vsyncpa [#allocation7], 0
    %10 = vsyncpa [#allocation5], 0
    // Predicated region
    $region2: #{tpu_custom_call.1} parent=1 // pred_check
      _
    $region3: #{tpu_custom_call.1} parent=1 // pred_check_branch
      %12 = sbr.rel (0) target = $region5
    $region4: #{tpu_custom_call.1} parent=1 // pred_region
      %s13 = sadd.s32 0, 0
      %s15 = ssub.s32 128, 128
      %16 = vsyncadd [#allocation4], %s15
      %s17 = smul.addr %s13, 128
      %s18 = scalar_lea.hbm %s0, %s17
      %s20 = sshll.u32 [#allocation3], 4
      %s21 = int_to_ptr.vmem [resolvable:$true] %s20
      %23 = dma.hbm_to_vmem [thread:$0]  %s18, 128, %s21, [#allocation4]
    $region5: #{tpu_custom_call.1} parent=1 // pred_fallthru
      _
    // Predicated region
    $region6: #{tpu_custom_call.1} parent=1 // pred_check
      _
    $region7: #{tpu_custom_call.1} parent=1 // pred_check_branch
      %25 = sbr.rel (0) target = $region9
    $region8: #{tpu_custom_call.1} parent=1 // pred_region
      %s26 = sadd.s32 0, 0
      %s28 = ssub.s32 128, 128
      %29 = vsyncadd [#allocation7], %s28
      %s30 = smul.addr %s26, 128
      %s31 = scalar_lea.hbm %s1, %s30
      %s33 = sshll.u32 [#allocation6], 4
      %s34 = int_to_ptr.vmem [resolvable:$true] %s33
      %36 = dma.hbm_to_vmem [thread:$0]  %s31, 128, %s34, [#allocation7]
    $region9: #{tpu_custom_call.1} parent=1 // pred_fallthru
      _
    // Predicated region
    $region10: #{tpu_custom_call.1} parent=1 // pred_check
      _
    $region11: #{tpu_custom_call.1} parent=1 // pred_check_branch
      %38 = sbr.rel (0) target = $region13
    $region12: #{tpu_custom_call.1} parent=1 // pred_region
      %s39 = sadd.s32 0, 0
      %s41 = ssub.s32 128, 128
      %42 = vsyncadd [#allocation7], %s41
      %s43 = smul.addr %s39, 128
      %s44 = scalar_lea.hbm %s2, %s43
      %s46 = sshll.u32 [#allocation8], 4
      %s47 = int_to_ptr.vmem [resolvable:$true] %s46
      %49 = dma.hbm_to_vmem [thread:$0]  %s44, 128, %s47, [#allocation7]
    $region13: #{tpu_custom_call.1} parent=1 // pred_fallthru
      _
    // Predicated region
    $region14: #{tpu_custom_call.1} parent=1 // pred_check
      _
    $region15: #{tpu_custom_call.1} parent=1 // pred_check_branch
      %51 = sbr.rel (0) target = $region17
    $region16: #{tpu_custom_call.1} parent=1 // pred_region
      %52 = dma.done [#allocation4], 128
    $region17: #{tpu_custom_call.1} parent=1 // pred_fallthru
      _
    // Predicated region
    $region18: #{tpu_custom_call.1} parent=1 // pred_check
      _
    $region19: #{tpu_custom_call.1} parent=1 // pred_check_branch
      %54 = sbr.rel (0) target = $region21
    $region20: #{tpu_custom_call.1} parent=1 // pred_region
      %55 = dma.done [#allocation7], 128
    $region21: #{tpu_custom_call.1} parent=1 // pred_fallthru
      _
    // Predicated region
    $region22: #{tpu_custom_call.1} parent=1 // pred_check
      _
    $region23: #{tpu_custom_call.1} parent=1 // pred_check_branch
      %57 = sbr.rel (0) target = $region25
    $region24: #{tpu_custom_call.1} parent=1 // pred_region
      %58 = dma.done [#allocation7], 128
    $region25: #{tpu_custom_call.1} parent=1 // pred_fallthru
      _
    %s59 = sadd.s32 0, 0
    %s60 = sadd.s32 0, 0
    %s61 = sadd.s32 0, 0
    %p62 = scmp.eq.s32.totalorder 0, 0
    // Predicated region
    $region26: #{tpu_custom_call.1} parent=1 // pred_check
      %p63 = pneg %p62
    $region27: #{tpu_custom_call.1} parent=1 // pred_check_branch
      %65 = sbr.rel (%p63) target = $region29
    $region28: #{tpu_custom_call.1} parent=1 // pred_region
      %vm66 = vcmask 7168
      %67 = vst.msk [vmem:[#allocation2] sm:$0xff] %vm66, 0.0
    $region29: #{tpu_custom_call.1} parent=1 // pred_fallthru
      _
    %v68 = vld [vmem:[#allocation3] sm:$0xff]
    %v69 = vld [vmem:[#allocation6] sm:$0xff]
    %v70 = vld [vmem:[#allocation8] sm:$0xff]
    %v71 = vmul.f32 %v68, %v69
    %vm72 = vcmask 261120
    %v73 = vsel %vm72, %v71, 0.0
    %74 = vadd.xlane.f32.xlu0 %v73
    %v75 = vpop.xlane.xlu0 %74
    %v76 = vmul.f32 %v68, %v70
    %v77 = vsel %vm72, %v76, 0.0
    %78 = vadd.xlane.f32.xlu0 %v77
    %v79 = vpop.xlane.xlu0 %78
    %v80 = vmul.f32 %v68, %v68
    %v81 = vsel %vm72, %v80, 0.0
    %82 = vadd.xlane.f32.xlu0 %v81
    %v83 = vpop.xlane.xlu0 %82
    %v84 = vmul.f32 %v69, %v69
    %v85 = vsel %vm72, %v84, 0.0
    %86 = vadd.xlane.f32.xlu0 %v85
    %v87 = vpop.xlane.xlu0 %86
    %v88 = vmul.f32 %v70, %v70
    %v89 = vsel %vm72, %v88, 0.0
    %90 = vadd.xlane.f32.xlu0 %v89
    %v91 = vpop.xlane.xlu0 %90
    %v92 = vmul.f32 %v83, %v87
    %v93 = vmax.f32 %v92, 1e-16
    %v94 = vrsqrt.pop %v93
    %v95 = vmul.f32 %v75, %v94
    %v96 = vmul.f32 %v83, %v91
    %v97 = vmax.f32 %v96, 1e-16
    %v98 = vrsqrt.pop %v97
    %v99 = vmul.f32 %v79, %v98
    %v100 = vsub.f32 1.0, %v95
    %v101 = vsub.f32 1.0, %v99
    %v102 = vsub.f32 %v100, %v101
    %v103 = vadd.f32 %v102, 0.2
    %v104 = vmax.f32 %v103, 0.0
    %s105 = sadd.s32 0, 0
    %s106 = smul.u32 %s105, 8
    %v107 = vlaneseq
    %v108 = vshrl.u32 %v107, 7
    %v109 = vstv %s106
    %v110 = vadd.s32 %v109, %v108
    %vm111 = vcmp.lt.s32.totalorder %v110, 8
    %v112 = vsel %vm111, %v104, 0.0
    %v113 = vld [vmem:[#allocation2] sm:$0xff]
    %v114 = vadd.f32 %v113, %v112
    %vm115 = vcmask 7168
    %116 = vst.msk [vmem:[#allocation2] sm:$0xff] %vm115, %v114
    // Predicated region
    $region30: #{tpu_custom_call.1} parent=1 // pred_check
      %p117 = pneg %p62
    $region31: #{tpu_custom_call.1} parent=1 // pred_check_branch
      %119 = sbr.rel (%p117) target = $region33
    $region32: #{tpu_custom_call.1} parent=1 // pred_region
      %v120 = vld [vmem:[#allocation2] sm:$0xff]
      %v121 = vsel %vm115, %v120, 0.0
      %v122 = vrot.slane %v121, 4
      %v123 = vadd.f32 %v121, %v122
      %v124 = vrot.slane %v123, 2
      %v125 = vadd.f32 %v123, %v124
      %v126 = vrot.slane %v125, 1
      %v127 = vadd.f32 %v125, %v126
      %129 = vset.pattern.permute.xlu0 0
      %130 = vperm.xlu0 %129, %v127
      %v131 = vpop.permute.xlu0 %130
      %133 = vst [vmem:[#allocation9] sm:$0xff] %v131
    $region33: #{tpu_custom_call.1} parent=1 // pred_fallthru
      _
    // Predicated region
    $region34: #{tpu_custom_call.1} parent=1 // pred_check
      _
    $region35: #{tpu_custom_call.1} parent=1 // pred_check_branch
      %135 = sbr.rel (0) target = $region37
    $region36: #{tpu_custom_call.1} parent=1 // pred_region
      %s137 = ssub.s32 128, 128
      %138 = vsyncadd [#allocation5], %s137
      %s140 = sshll.u32 [#allocation9], 4
      %s141 = int_to_ptr.vmem [resolvable:$true] %s140
      %143 = dma.vmem_to_hbm [thread:$0]  %s141, 128, %s3, [#allocation5]
    $region37: #{tpu_custom_call.1} parent=1 // pred_fallthru
      _
    // Predicated region
    $region38: #{tpu_custom_call.1} parent=1 // pred_check
      _
    $region39: #{tpu_custom_call.1} parent=1 // pred_check_branch
      %145 = sbr.rel (0) target = $region41
    $region40: #{tpu_custom_call.1} parent=1 // pred_region
      %146 = dma.done [#allocation5], 128
    $region41: #{tpu_custom_call.1} parent=1 // pred_fallthru
      _
    %147 = vsyncpa [#allocation4], 1
    %148 = vsyncpa [#allocation7], 1
    %149 = vsyncpa [#allocation5], 1

</llo_original>
